<compile_context>
chip_gen: v7x
topology: tpu7x:2x2x1
jax: 0.10.0
libtpu: 0.0.40
codegen_flags: <defaults>
</compile_context>

<pallas_src>
import functools

import jax
import jax.numpy as jnp
from jax import lax
from jax.experimental import pallas as pl
from jax.experimental.pallas import tpu as pltpu


# -----------------------------------------------------------------------------
# Kernels
# -----------------------------------------------------------------------------
def _stats_kernel(x_ref, w_ref, s1_ref, s2_ref):
    # grid = (split, N, tiles_per).  x_ref: (1, Cin, tile_hw)  w_ref: (Cout, Cin)
    # s1_ref/s2_ref: (1, 1, Cout, 1) resident accumulators across the tile axis.
    t = pl.program_id(2)
    y0 = jnp.dot(w_ref[...], x_ref[0], preferred_element_type=jnp.float32)  # (Cout, thw)
    s1 = jnp.sum(y0, axis=1, keepdims=True)
    s2 = jnp.sum(y0 * y0, axis=1, keepdims=True)

    @pl.when(t == 0)
    def _():
        s1_ref[0, 0] = s1
        s2_ref[0, 0] = s2

    @pl.when(t != 0)
    def _():
        s1_ref[0, 0] = s1_ref[0, 0] + s1
        s2_ref[0, 0] = s2_ref[0, 0] + s2


def _stats_y0_kernel(x_ref, w_ref, y0_ref, s1_ref, s2_ref):
    # Same as _stats_kernel, but also materializes the bias-free conv output y0
    # (typically bf16) so pass 2 does not need to re-read x (Cin >> Cout regime).
    t = pl.program_id(2)
    y0 = jnp.dot(w_ref[...], x_ref[0], preferred_element_type=jnp.float32)
    y0_ref[0] = y0.astype(y0_ref.dtype)
    s1 = jnp.sum(y0, axis=1, keepdims=True)
    s2 = jnp.sum(y0 * y0, axis=1, keepdims=True)

    @pl.when(t == 0)
    def _():
        s1_ref[0, 0] = s1
        s2_ref[0, 0] = s2

    @pl.when(t != 0)
    def _():
        s1_ref[0, 0] = s1_ref[0, 0] + s1
        s2_ref[0, 0] = s2_ref[0, 0] + s2


def _norm_recompute_kernel(x_ref, w_ref, ss_ref, o_ref):
    # x_ref: (1, Cin, tile_hw)  w_ref: (Cout, Cin)  ss_ref: (1, Cout, 2) f32
    y0 = jnp.dot(w_ref[...], x_ref[0], preferred_element_type=jnp.float32)
    ss = ss_ref[0]
    o_ref[0] = jnp.maximum(y0 * ss[:, 0:1] + ss[:, 1:2], 0.0).astype(o_ref.dtype)


def _norm_apply_kernel(y0_ref, ss_ref, o_ref):
    # y0_ref: (1, Cout, tile_hw) (bf16)   ss_ref: (1, Cout, 2) f32
    y0 = y0_ref[0].astype(jnp.float32)
    ss = ss_ref[0]
    o_ref[0] = jnp.maximum(y0 * ss[:, 0:1] + ss[:, 1:2], 0.0).astype(o_ref.dtype)


def _fused_kernel(x_ref, w_ref, b_ref, gmat_ref, gam_ref, bet_ref, o_ref,
                  *, hw_true, cpg, eps):
    # One sample per grid step: x_ref (1, Cin, HWp) -> o_ref (1, Cout, HWp).
    y0 = jnp.dot(w_ref[...], x_ref[0], preferred_element_type=jnp.float32)  # (Cout, HWp)
    s1 = jnp.sum(y0, axis=1, keepdims=True)            # (Cout, 1), padding adds 0
    s2 = jnp.sum(y0 * y0, axis=1, keepdims=True)
    b = b_ref[...]                                      # (Cout, 1)
    hw = jnp.float32(hw_true)
    sy1 = s1 + hw * b                                   # sum of y  = y0 + b (true HW)
    sy2 = s2 + 2.0 * b * s1 + hw * (b * b)              # sum of y^2
    # Group fold on the MXU via the tiny block-diagonal membership matrix: each row
    # directly receives its group's sum (already broadcast back to channels).
    gs1 = jnp.dot(gmat_ref[...], sy1, preferred_element_type=jnp.float32)   # (Cout, 1)
    gs2 = jnp.dot(gmat_ref[...], sy2, preferred_element_type=jnp.float32)
    count = jnp.float32(hw_true * cpg)
    mean = gs1 / count
    var = jnp.maximum(gs2 / count - mean * mean, 0.0)
    inv = lax.rsqrt(var + jnp.float32(eps))
    scale = inv * gam_ref[...]
    shift = (b - mean) * scale + bet_ref[...]
    o_ref[0] = jnp.maximum(y0 * scale + shift, 0.0).astype(o_ref.dtype)


# -----------------------------------------------------------------------------
# Planning helpers
# -----------------------------------------------------------------------------
def _cdiv(a, b):
    return -(-a // b)


def _round_up(a, m):
    return _cdiv(a, m) * m


def _vmem_plan():
    """(tile budget bytes, vmem_limit_bytes) chosen per TPU generation."""
    try:
        cap = int(getattr(pltpu.get_tpu_info(), "vmem_capacity_bytes", 0) or 0)
    except Exception:
        cap = 0
    if cap == 0:
        # Unknown generation: be conservative (safe on v7x, mildly undershoots v6e).
        return 16 << 20, 48 << 20
    if cap <= (64 << 20):          # v7x-class TensorCore: 64 MiB physical VMEM
        return 14 << 20, min(cap, 48 << 20)
    return 22 << 20, 64 << 20       # v5e / v6e: 128 MiB physical VMEM


# -----------------------------------------------------------------------------
# Wrapper
# -----------------------------------------------------------------------------
def channel_reducer(x_nchw, conv_w, conv_b, gn_gamma, gn_beta,
                    *, num_groups=32, eps=1e-5, out_dtype=jnp.float32,
                    mode=None, hw_tile=None, y0_dtype=jnp.bfloat16):
    """1x1 conv -> GroupNorm(num_groups) -> ReLU.

    x_nchw: (N, Cin, H, W) (f32 or bf16 -- never cast here), conv_w: (Cout, Cin, 1, 1).
    Returns (N, Cout, H, W) in out_dtype.  `mode`/`hw_tile` override auto dispatch.
    """
    if isinstance(x_nchw, (tuple, list)) and len(x_nchw) == 1:   # match module.forward
        x_nchw = x_nchw[0]

    N, Cin, H, W = x_nchw.shape
    Cout = conv_w.shape[0]
    assert Cout % num_groups == 0
    cpg = Cout // num_groups
    HW = H * W

    # Free reshapes only; weight cast is tiny (x is NOT cast -- see module docstring).
    x = x_nchw.reshape(N, Cin, HW)
    w = conv_w.reshape(Cout, Cin).astype(x.dtype)
    x_item = jnp.dtype(x.dtype).itemsize
    out_item = jnp.dtype(out_dtype).itemsize
    y0_item = jnp.dtype(y0_dtype).itemsize

    budget, vmem_limit = _vmem_plan()

    # ------------------------------ mode dispatch ---------------------------------
    HWp_fused = _round_up(HW, 128)
    fused_bytes = (HWp_fused * (2 * Cin * x_item + 2 * Cout * out_item + Cout * 4)
                   + 2 * Cout * Cin * x_item + Cout * Cout * 4 + 6 * Cout * 4)
    if mode is None:
        if fused_bytes <= budget:
            mode = "fused"
        elif Cin * x_item < 2 * Cout * y0_item:
            mode = "recompute"        # re-reading x is cheaper than y0 write+read
        else:
            mode = "materialize"      # true channel-reducer regime (Cin >> Cout)
    assert mode in ("fused", "recompute", "materialize")

    # ------------------------------ fused single pass ------------------------------
    if mode == "fused":
        HWp = HWp_fused
        xp = x if HWp == HW else jnp.pad(x, ((0, 0), (0, 0), (0, HWp - HW)))
        b_col = conv_b.astype(jnp.float32).reshape(Cout, 1)
        gam_col = gn_gamma.astype(jnp.float32).reshape(Cout, 1)
        bet_col = gn_beta.astype(jnp.float32).reshape(Cout, 1)
        cid = jnp.arange(Cout) // cpg
        gmat = (cid[:, None] == cid[None, :]).astype(jnp.float32)   # (Cout, Cout)
        kern = functools.partial(_fused_kernel, hw_true=HW, cpg=cpg, eps=eps)
        out = pl.pallas_call(
            kern,
            out_shape=jax.ShapeDtypeStruct((N, Cout, HWp), out_dtype),
            grid_spec=pltpu.PrefetchScalarGridSpec(
                num_scalar_prefetch=0, grid=(N,),
                in_specs=[
                    pl.BlockSpec((1, Cin, HWp), lambda n: (n, 0, 0)),
                    pl.BlockSpec((Cout, Cin), lambda n: (0, 0)),
                    pl.BlockSpec((Cout, 1), lambda n: (0, 0)),
                    pl.BlockSpec((Cout, Cout), lambda n: (0, 0)),
                    pl.BlockSpec((Cout, 1), lambda n: (0, 0)),
                    pl.BlockSpec((Cout, 1), lambda n: (0, 0)),
                ],
                out_specs=pl.BlockSpec((1, Cout, HWp), lambda n: (n, 0, 0)),
            ),
            compiler_params=pltpu.CompilerParams(
                dimension_semantics=("parallel",),
                vmem_limit_bytes=vmem_limit),
            cost_estimate=pl.CostEstimate(
                flops=int(2 * N * Cout * HWp * (Cin + 3) + 4 * N * Cout * Cout),
                transcendentals=int(N * num_groups),
                bytes_accessed=int(xp.size * x_item + w.size * x_item
                                   + N * Cout * HWp * out_item)),
        )(xp, w, b_col, gmat, gam_col, bet_col)
        out = out if HWp == HW else out[:, :, :HW]
        return out.reshape(N, Cout, H, W)

    # -------------------------- streaming two-pass plan ---------------------------
    per_px = 2 * Cin * x_item + 2 * Cout * max(out_item, y0_item) + 3 * Cout * 4
    fixed = 2 * Cout * Cin * x_item + 4 * Cout * 4
    if hw_tile is not None:
        tile_hw = max(128, (int(hw_tile) // 128) * 128)
        num_tiles = _cdiv(HW, tile_hw)
    else:
        avail = max(budget - fixed, 128 * per_px)
        target = max(128, (avail // per_px) // 128 * 128)
        num_tiles = _cdiv(HW, target)
        tile_hw = _round_up(_cdiv(HW, num_tiles), 128)
    HWp = tile_hw * num_tiles                      # padding waste < 128 * num_tiles px
    xp = x if HWp == HW else jnp.pad(x, ((0, 0), (0, 0), (0, HWp - HW)))

    # Extra parallel split of the stats pass so v7x's second TensorCore has work.
    split = 2 if (num_tiles >= 2 and num_tiles % 2 == 0) else 1
    tiles_per = num_tiles // split

    def _p1_main_idx(tp):
        def idx(s, n, t):
            return (n, 0, s * tp + t)
        return idx

    x_spec_p1 = pl.BlockSpec((1, Cin, tile_hw), _p1_main_idx(tiles_per))
    w_spec_p1 = pl.BlockSpec((Cout, Cin), lambda s, n, t: (0, 0))
    acc_spec = pl.BlockSpec((1, 1, Cout, 1), lambda s, n, t: (s, n, 0, 0))
    acc_shape = jax.ShapeDtypeStruct((split, N, Cout, 1), jnp.float32)
    p1_params = pltpu.CompilerParams(
        dimension_semantics=("parallel", "parallel", "arbitrary"),
        vmem_limit_bytes=vmem_limit)
    p1_flops = int(2 * N * Cout * HWp * (Cin + 2))
    p1_bytes = int(xp.size * x_item + w.size * x_item + 2 * split * N * Cout * 4)

    # ---------------- pass 1: stats (and optionally materialize y0) ---------------
    if mode == "materialize":
        y0_out_spec = pl.BlockSpec((1, Cout, tile_hw), _p1_main_idx(tiles_per))
        y0_hbm, s1p, s2p = pl.pallas_call(
            _stats_y0_kernel,
            out_shape=(jax.ShapeDtypeStruct((N, Cout, HWp), y0_dtype),
                       acc_shape, acc_shape),
            grid_spec=pltpu.PrefetchScalarGridSpec(
                num_scalar_prefetch=0, grid=(split, N, tiles_per),
                in_specs=[x_spec_p1, w_spec_p1],
                out_specs=[y0_out_spec, acc_spec, acc_spec]),
            compiler_params=p1_params,
            cost_estimate=pl.CostEstimate(
                flops=p1_flops, transcendentals=0,
                bytes_accessed=p1_bytes + int(N * Cout * HWp * y0_item)),
        )(xp, w)
    else:
        s1p, s2p = pl.pallas_call(
            _stats_kernel,
            out_shape=(acc_shape, acc_shape),
            grid_spec=pltpu.PrefetchScalarGridSpec(
                num_scalar_prefetch=0, grid=(split, N, tiles_per),
                in_specs=[x_spec_p1, w_spec_p1],
                out_specs=[acc_spec, acc_spec]),
            compiler_params=p1_params,
            cost_estimate=pl.CostEstimate(
                flops=p1_flops, transcendentals=0, bytes_accessed=p1_bytes),
        )(xp, w)

    # ---------------- tiny glue: group fold + (scale, shift) per channel ----------
    s1 = s1p.sum(axis=0)[..., 0]                         # (N, Cout)
    s2 = s2p.sum(axis=0)[..., 0]
    b = conv_b.astype(jnp.float32)[None, :]              # (1, Cout)
    sy1 = s1 + HW * b                                     # stats use the TRUE HW
    sy2 = s2 + 2.0 * b * s1 + HW * (b * b)
    count = jnp.float32(HW * cpg)
    gs1 = sy1.reshape(N, num_groups, cpg).sum(axis=2)
    gs2 = sy2.reshape(N, num_groups, cpg).sum(axis=2)
    mean = gs1 / count
    var = jnp.maximum(gs2 / count - mean * mean, 0.0)     # clamp against cancellation
    inv = lax.rsqrt(var + jnp.float32(eps))
    mean_c = jnp.repeat(mean, cpg, axis=1)                # (N, Cout)
    inv_c = jnp.repeat(inv, cpg, axis=1)
    gamma = gn_gamma.astype(jnp.float32)[None, :]
    beta = gn_beta.astype(jnp.float32)[None, :]
    scale = inv_c * gamma                                 # out = relu(y0*scale + shift)
    shift = (b - mean_c) * scale + beta
    ss = jnp.stack([scale, shift], axis=-1)               # (N, Cout, 2) f32

    # ---------------- pass 2: normalize + ReLU -------------------------------------
    stream_px = Cin * x_item if mode == "recompute" else Cout * y0_item
    use_buf3 = (tile_hw < 512 and num_tiles > 1
                and stream_px * tile_hw <= budget // 8)
    main_block = (1, Cin, tile_hw) if mode == "recompute" else (1, Cout, tile_hw)
    if use_buf3:
        main_spec = pl.BlockSpec(main_block, lambda n, t: (n, 0, t),
                                 pipeline_mode=pl.Buffered(3))
    else:
        main_spec = pl.BlockSpec(main_block, lambda n, t: (n, 0, t))
    ss_spec = pl.BlockSpec((1, Cout, 2), lambda n, t: (n, 0, 0))
    out_spec = pl.BlockSpec((1, Cout, tile_hw), lambda n, t: (n, 0, t))
    p2_params = pltpu.CompilerParams(
        dimension_semantics=("parallel", "parallel"),
        vmem_limit_bytes=vmem_limit)

    if mode == "recompute":
        out = pl.pallas_call(
            _norm_recompute_kernel,
            out_shape=jax.ShapeDtypeStruct((N, Cout, HWp), out_dtype),
            grid_spec=pltpu.PrefetchScalarGridSpec(
                num_scalar_prefetch=0, grid=(N, num_tiles),
                in_specs=[main_spec,
                          pl.BlockSpec((Cout, Cin), lambda n, t: (0, 0)),
                          ss_spec],
                out_specs=out_spec),
            compiler_params=p2_params,
            cost_estimate=pl.CostEstimate(
                flops=int(2 * N * Cout * HWp * (Cin + 1)), transcendentals=0,
                bytes_accessed=int(xp.size * x_item + w.size * x_item + ss.size * 4
                                   + N * Cout * HWp * out_item)),
        )(xp, w, ss)
    else:
        out = pl.pallas_call(
            _norm_apply_kernel,
            out_shape=jax.ShapeDtypeStruct((N, Cout, HWp), out_dtype),
            grid_spec=pltpu.PrefetchScalarGridSpec(
                num_scalar_prefetch=0, grid=(N, num_tiles),
                in_specs=[main_spec, ss_spec],
                out_specs=out_spec),
            compiler_params=p2_params,
            cost_estimate=pl.CostEstimate(
                flops=int(3 * N * Cout * HWp), transcendentals=0,
                bytes_accessed=int(N * Cout * HWp * (y0_item + out_item) + ss.size * 4)),
        )(y0_hbm, ss)

    out = out if HWp == HW else out[:, :, :HW]
    return out.reshape(N, Cout, H, W)


# -----------------------------------------------------------------------------
# Pure-JAX reference (matches PyTorch Conv2d(1x1) -> GroupNorm(32) -> ReLU)
# -----------------------------------------------------------------------------
def _reference(x_nchw, conv_w, conv_b, gn_gamma, gn_beta, num_groups=32, eps=1e-5):
    N, Cin, H, W = x_nchw.shape
    Cout = conv_w.shape[0]
    y = jnp.einsum('nchw,oc->nohw', x_nchw, conv_w.reshape(Cout, Cin)) \
        + conv_b[None, :, None, None]
    yg = y.reshape(N, num_groups, Cout // num_groups, H, W)
    mean = jnp.mean(yg, axis=(2, 3, 4), keepdims=True)
    var = jnp.mean((yg - mean) ** 2, axis=(2, 3, 4), keepdims=True)
    yn = ((yg - mean) / jnp.sqrt(var + eps)).reshape(N, Cout, H, W)
    out = yn * gn_gamma[None, :, None, None] + gn_beta[None, :, None, None]
    return jnp.maximum(out, 0.0)


if __name__ == "__main__":
    key = jax.random.PRNGKey(0)
    kx, kw, kb, kx2, kw2, kb2 = jax.random.split(key, 6)

    # --- case A: auto dispatch (fused single pass), f32 ---------------------------
    N, Cin, Cout, H, W = 2, 8, 64, 16, 16
    x = jax.random.normal(kx, (N, Cin, H, W), jnp.float32)
    bound = 1.0 / (Cin ** 0.5)
    conv_w = jax.random.uniform(kw, (Cout, Cin, 1, 1), jnp.float32, -bound, bound)
    conv_b = jax.random.uniform(kb, (Cout,), jnp.float32, -bound, bound)
    gamma = jnp.ones((Cout,), jnp.float32)
    beta = jnp.zeros((Cout,), jnp.float32)
    ref = _reference(x, conv_w, conv_b, gamma, beta)

    out_a = jax.block_until_ready(channel_reducer(x, conv_w, conv_b, gamma, beta))
    assert out_a.shape == (N, Cout, H, W)
    assert jnp.allclose(out_a, ref, rtol=1e-3, atol=1e-3)

    # --- case B: forced streaming recompute path (multi-tile, split stats axis,
    #             Buffered(3) on the pass-2 x stream) ------------------------------
    out_b = jax.block_until_ready(
        channel_reducer(x, conv_w, conv_b, gamma, beta,
                        mode="recompute", hw_tile=128))
    assert jnp.allclose(out_b, ref, rtol=1e-3, atol=1e-3)

    # --- case C: forced materialize-y0 path + HW padding (HW=100 -> 128) ----------
    N2, Cin2, Cout2, H2, W2 = 1, 96, 64, 10, 10
    x2 = jax.random.normal(kx2, (N2, Cin2, H2, W2), jnp.float32)
    bound2 = 1.0 / (Cin2 ** 0.5)
    conv_w2 = jax.random.uniform(kw2, (Cout2, Cin2, 1, 1), jnp.float32, -bound2, bound2)
    conv_b2 = jax.random.uniform(kb2, (Cout2,), jnp.float32, -bound2, bound2)
    gamma2 = jnp.ones((Cout2,), jnp.float32)
    beta2 = jnp.zeros((Cout2,), jnp.float32)
    ref2 = _reference(x2, conv_w2, conv_b2, gamma2, beta2)
    out_c = jax.block_until_ready(
        channel_reducer(x2, conv_w2, conv_b2, gamma2, beta2, mode="materialize"))
    assert out_c.shape == (N2, Cout2, H2, W2)
    assert jnp.allclose(out_c, ref2, rtol=5e-2, atol=5e-2)

    # --- case D: producer-side bf16 x + bf16 output (no wrapper cast of x) --------
    out_d = jax.block_until_ready(
        channel_reducer(x.astype(jnp.bfloat16), conv_w, conv_b, gamma, beta,
                        out_dtype=jnp.bfloat16))
    assert out_d.dtype == jnp.bfloat16
    assert jnp.allclose(out_d.astype(jnp.float32), ref, rtol=5e-2, atol=5e-2)

    print("KERNEL_OK")
</pallas_src>

<mosaic_0001>
module attributes {stable_mosaic.version = 11 : i64} {
  func.func @_fused_kernel(%arg0: i32, %arg1: memref<1x8x256xf32, #tpu.memory_space<vmem>>, %arg2: memref<64x8xf32, #tpu.memory_space<vmem>>, %arg3: memref<64x1xf32, #tpu.memory_space<vmem>>, %arg4: memref<64x64xf32, #tpu.memory_space<vmem>>, %arg5: memref<64x1xf32, #tpu.memory_space<vmem>>, %arg6: memref<64x1xf32, #tpu.memory_space<vmem>>, %arg7: memref<1x64x256xf32, #tpu.memory_space<vmem>>) attributes {dimension_semantics = [#tpu.dimension_semantics<parallel>], iteration_bounds = array<i64: 2>, scalar_prefetch = 0 : i64, scratch_operands = 0 : i64, tpu.core_type = #tpu.core_type<tc>, window_params = [{transform_indices = @transform_0, window_bounds = array<i64: 1, 8, 256>}, {pipeline_mode = #tpu.pipeline_mode<synchronous>, transform_indices = @transform_1, window_bounds = array<i64: 64, 8>}, {pipeline_mode = #tpu.pipeline_mode<synchronous>, transform_indices = @transform_2, window_bounds = array<i64: 64, 1>}, {pipeline_mode = #tpu.pipeline_mode<synchronous>, transform_indices = @transform_3, window_bounds = array<i64: 64, 64>}, {pipeline_mode = #tpu.pipeline_mode<synchronous>, transform_indices = @transform_4, window_bounds = array<i64: 64, 1>}, {pipeline_mode = #tpu.pipeline_mode<synchronous>, transform_indices = @transform_5, window_bounds = array<i64: 64, 1>}, {transform_indices = @transform_6, window_bounds = array<i64: 1, 64, 256>}]} {
    %c0 = arith.constant 0 : index
    %c0_0 = arith.constant 0 : index
    %0 = vector.load %arg2[%c0, %c0_0] : memref<64x8xf32, #tpu.memory_space<vmem>>, vector<64x8xf32>
    %c0_1 = arith.constant 0 : index
    %c0_2 = arith.constant 0 : index
    %c0_3 = arith.constant 0 : index
    %1 = vector.load %arg1[%c0_1, %c0_2, %c0_3] : memref<1x8x256xf32, #tpu.memory_space<vmem>>, vector<1x8x256xf32>
    %2 = vector.shape_cast %1 : vector<1x8x256xf32> to vector<8x256xf32>
    %cst = arith.constant dense<0.000000e+00> : vector<64x256xf32>
    %3 = tpu.matmul %0, %2, %cst {dimension_numbers = #tpu.dot_dimension_numbers<[1], [0], [0], [1], [0, 0, 1, 1], [], []>} : vector<64x8xf32>, vector<8x256xf32>, vector<64x256xf32> -> vector<64x256xf32>
    %cst_4 = arith.constant dense<0.000000e+00> : vector<64xf32>
    %4 = vector.multi_reduction <add>, %3, %cst_4 [1] : vector<64x256xf32> to vector<64xf32>
    %5 = vector.shape_cast %4 : vector<64xf32> to vector<64x1xf32>
    %6 = arith.mulf %3, %3 : vector<64x256xf32>
    %cst_5 = arith.constant dense<0.000000e+00> : vector<64xf32>
    %7 = vector.multi_reduction <add>, %6, %cst_5 [1] : vector<64x256xf32> to vector<64xf32>
    %8 = vector.shape_cast %7 : vector<64xf32> to vector<64x1xf32>
    %c0_6 = arith.constant 0 : index
    %c0_7 = arith.constant 0 : index
    %9 = vector.load %arg3[%c0_6, %c0_7] : memref<64x1xf32, #tpu.memory_space<vmem>>, vector<64x1xf32>
    %cst_8 = arith.constant 2.560000e+02 : f32
    %10 = vector.broadcast %cst_8 : f32 to vector<64x1xf32>
    %11 = arith.mulf %10, %9 : vector<64x1xf32>
    %12 = arith.addf %5, %11 : vector<64x1xf32>
    %cst_9 = arith.constant 2.000000e+00 : f32
    %13 = vector.broadcast %cst_9 : f32 to vector<64x1xf32>
    %14 = arith.mulf %13, %9 : vector<64x1xf32>
    %15 = arith.mulf %14, %5 : vector<64x1xf32>
    %16 = arith.addf %8, %15 : vector<64x1xf32>
    %17 = arith.mulf %9, %9 : vector<64x1xf32>
    %cst_10 = arith.constant 2.560000e+02 : f32
    %18 = vector.broadcast %cst_10 : f32 to vector<64x1xf32>
    %19 = arith.mulf %18, %17 : vector<64x1xf32>
    %20 = arith.addf %16, %19 : vector<64x1xf32>
    %c0_11 = arith.constant 0 : index
    %c0_12 = arith.constant 0 : index
    %21 = vector.load %arg4[%c0_11, %c0_12] : memref<64x64xf32, #tpu.memory_space<vmem>>, vector<64x64xf32>
    %cst_13 = arith.constant dense<0.000000e+00> : vector<64x1xf32>
    %22 = tpu.matmul %21, %12, %cst_13 {dimension_numbers = #tpu.dot_dimension_numbers<[1], [0], [0], [1], [0, 0, 1, 1], [], []>} : vector<64x64xf32>, vector<64x1xf32>, vector<64x1xf32> -> vector<64x1xf32>
    %c0_14 = arith.constant 0 : index
    %c0_15 = arith.constant 0 : index
    %23 = vector.load %arg4[%c0_14, %c0_15] : memref<64x64xf32, #tpu.memory_space<vmem>>, vector<64x64xf32>
    %cst_16 = arith.constant dense<0.000000e+00> : vector<64x1xf32>
    %24 = tpu.matmul %23, %20, %cst_16 {dimension_numbers = #tpu.dot_dimension_numbers<[1], [0], [0], [1], [0, 0, 1, 1], [], []>} : vector<64x64xf32>, vector<64x1xf32>, vector<64x1xf32> -> vector<64x1xf32>
    %cst_17 = arith.constant 5.120000e+02 : f32
    %25 = vector.broadcast %cst_17 : f32 to vector<64x1xf32>
    %26 = arith.divf %22, %25 : vector<64x1xf32>
    %cst_18 = arith.constant 5.120000e+02 : f32
    %27 = vector.broadcast %cst_18 : f32 to vector<64x1xf32>
    %28 = arith.divf %24, %27 : vector<64x1xf32>
    %29 = arith.mulf %26, %26 : vector<64x1xf32>
    %30 = arith.subf %28, %29 : vector<64x1xf32>
    %cst_19 = arith.constant 0.000000e+00 : f32
    %31 = vector.broadcast %cst_19 : f32 to vector<64x1xf32>
    %32 = arith.maximumf %30, %31 : vector<64x1xf32>
    %cst_20 = arith.constant 9.99999974E-6 : f32
    %33 = vector.broadcast %cst_20 : f32 to vector<64x1xf32>
    %34 = arith.addf %32, %33 : vector<64x1xf32>
    %35 = math.rsqrt %34 : vector<64x1xf32>
    %c0_21 = arith.constant 0 : index
    %c0_22 = arith.constant 0 : index
    %36 = vector.load %arg5[%c0_21, %c0_22] : memref<64x1xf32, #tpu.memory_space<vmem>>, vector<64x1xf32>
    %37 = arith.mulf %35, %36 : vector<64x1xf32>
    %38 = arith.subf %9, %26 : vector<64x1xf32>
    %39 = arith.mulf %38, %37 : vector<64x1xf32>
    %c0_23 = arith.constant 0 : index
    %c0_24 = arith.constant 0 : index
    %40 = vector.load %arg6[%c0_23, %c0_24] : memref<64x1xf32, #tpu.memory_space<vmem>>, vector<64x1xf32>
    %41 = arith.addf %39, %40 : vector<64x1xf32>
    %42 = vector.broadcast %37 : vector<64x1xf32> to vector<64x256xf32>
    %43 = arith.mulf %3, %42 : vector<64x256xf32>
    %44 = vector.broadcast %41 : vector<64x1xf32> to vector<64x256xf32>
    %45 = arith.addf %43, %44 : vector<64x256xf32>
    %cst_25 = arith.constant 0.000000e+00 : f32
    %46 = vector.broadcast %cst_25 : f32 to vector<64x256xf32>
    %47 = arith.maximumf %45, %46 : vector<64x256xf32>
    %c0_26 = arith.constant 0 : index
    %c0_27 = arith.constant 0 : index
    %c0_28 = arith.constant 0 : index
    %48 = vector.load %arg7[%c0_26, %c0_27, %c0_28] : memref<1x64x256xf32, #tpu.memory_space<vmem>>, vector<1x64x256xf32>
    %49 = vector.shape_cast %48 : vector<1x64x256xf32> to vector<64x256xf32>
    %50 = vector.shape_cast %47 : vector<64x256xf32> to vector<1x64x256xf32>
    tpu.vector_store %arg7[%c0_26, %c0_27, %c0_28], %50 {strides = array<i32>} : memref<1x64x256xf32, #tpu.memory_space<vmem>>, vector<1x64x256xf32>,
    return
  }
  func.func @transform_0(%arg0: i32) -> (i32, i32, i32) {
    %c0_i32 = arith.constant 0 : i32
    %c0_i32_0 = arith.constant 0 : i32
    %c0_i32_1 = arith.constant 0 : i32
    return %arg0, %c0_i32, %c0_i32_0 : i32, i32, i32
  }
  func.func @transform_1(%arg0: i32) -> (i32, i32) {
    %c0_i32 = arith.constant 0 : i32
    %c0_i32_0 = arith.constant 0 : i32
    %c0_i32_1 = arith.constant 0 : i32
    return %c0_i32, %c0_i32_0 : i32, i32
  }
  func.func @transform_2(%arg0: i32) -> (i32, i32) {
    %c0_i32 = arith.constant 0 : i32
    %c0_i32_0 = arith.constant 0 : i32
    %c0_i32_1 = arith.constant 0 : i32
    return %c0_i32, %c0_i32_0 : i32, i32
  }
  func.func @transform_3(%arg0: i32) -> (i32, i32) {
    %c0_i32 = arith.constant 0 : i32
    %c0_i32_0 = arith.constant 0 : i32
    %c0_i32_1 = arith.constant 0 : i32
    return %c0_i32, %c0_i32_0 : i32, i32
  }
  func.func @transform_4(%arg0: i32) -> (i32, i32) {
    %c0_i32 = arith.constant 0 : i32
    %c0_i32_0 = arith.constant 0 : i32
    %c0_i32_1 = arith.constant 0 : i32
    return %c0_i32, %c0_i32_0 : i32, i32
  }
  func.func @transform_5(%arg0: i32) -> (i32, i32) {
    %c0_i32 = arith.constant 0 : i32
    %c0_i32_0 = arith.constant 0 : i32
    %c0_i32_1 = arith.constant 0 : i32
    return %c0_i32, %c0_i32_0 : i32, i32
  }
  func.func @transform_6(%arg0: i32) -> (i32, i32, i32) {
    %c0_i32 = arith.constant 0 : i32
    %c0_i32_0 = arith.constant 0 : i32
    %c0_i32_1 = arith.constant 0 : i32
    return %arg0, %c0_i32, %c0_i32_0 : i32, i32, i32
  }
}

</mosaic_0001>

<llo_original>
// kernel: tpu_custom_call.1
$region0: #{tpu_custom_call.1}
  #allocation0 [shape = 'u32[]', space=smem, size = 0x4, offset = 0x4, fixed_abs, tag = 'smem constant byte address 0x4 - core index']
  #allocation1 [shape = 'u32[144,128]{1,0:T(1,128)}', space=vmem, size = 0x12000, scoped, tag = 'internal scratch']
  %s0 = inlined_call_operand.vmem [shape: f32[2,8,256], index: 0, kind: input, shape index: {}]
  %s1 = inlined_call_operand.vmem [shape: f32[64,8], index: 1, kind: input, shape index: {}]
  %s2 = inlined_call_operand.vmem [shape: f32[64,1], index: 2, kind: input, shape index: {}]
  %s3 = inlined_call_operand.vmem [shape: f32[64,64], index: 3, kind: input, shape index: {}]
  %s4 = inlined_call_operand.vmem [shape: f32[64,1], index: 4, kind: input, shape index: {}]
  %s5 = inlined_call_operand.vmem [shape: f32[64,1], index: 5, kind: input, shape index: {}]
  %s6 = inlined_call_operand.hbm [shape: f32[2,64,256], index: 6, kind: output, shape index: {}]
  %s7 = sld [smem:[#allocation0]]
  $region57: #{tpu_custom_call.1} parent=0
    _
  %s9 = ssub.s32 1, %s7
  %s10 = scalar_select 0, %s9, %s7
  $region1: #{tpu_custom_call.1} parent=0
    #allocation2 [shape = 'u8[131072]{0}', space=vmem, size = 0x20000, scoped, tag = 'output window, operand 0']
    #allocation3 [shape = 's32[2]{0}', space=sflag, size = 0x8, scoped, tag = 'scoped memory for tpu_custom_call.1']
    %11 = vsyncpa [#allocation3], 0
    %s12 = scalar_lea.sflag [#allocation3], 1
    %13 = vsyncpa %s12, 0
    loop: start=0, step=1, limit=4
    $region2: #{tpu_custom_call.1} parent=1 // loop_pre_header
      _
    $region3: #{tpu_custom_call.1} parent=1 // loop_header
      %s15 = sphi 0, %s19
      %p16 = scmp.ge.s32.totalorder %s15, 4
      %s25 = sphi 0, %s27
      %s28 = sphi 0, %s25
      %s29 = sphi 0, %s28
      %s45 = sphi 0, %s29
      %s49 = sphi 0, %s49
      %s51 = sphi 0, %s49
      %s52 = sphi 0, %s51
      %s66 = sphi 0, %s52
      %s70 = sphi 0, %s70
      %s72 = sphi 0, %s70
      %s73 = sphi 0, %s72
      %s87 = sphi 0, %s73
      %s91 = sphi 0, %s91
      %s93 = sphi 0, %s91
      %s94 = sphi 0, %s93
      %s108 = sphi 0, %s94
      %s112 = sphi 0, %s112
      %s114 = sphi 0, %s112
      %s115 = sphi 0, %s114
      %s129 = sphi 0, %s115
      %s133 = sphi 0, %s133
      %s135 = sphi 0, %s133
      %s136 = sphi 0, %s135
      %s150 = sphi 0, %s136
      %s156 = sphi 0, %s158
      %s159 = sphi 0, %s156
      %s160 = sphi 0, %s159
      %s176 = sphi 0, %s160
    $region4: #{tpu_custom_call.1} parent=1 // loop_header_branch
      %18 = sbr.rel (%p16) target = $region8
    $region5: #{tpu_custom_call.1} parent=1 // loop_body
      %s20 = ssub.s32 %s15, 1
      %s21 = ssub.s32 %s15, 2
      %s22 = sadd.s32 %s15, 1
      %s23 = ssub.s32 %s15, %s22
      %p24 = scmp.eq.s32.totalorder %s23, 0
      %s26 = sadd.s32 %s25, 1
      %s27 = scalar_select %p24, %s25, %s26
      %p30 = pneg %p24
      %p31 = scmp.eq.s32.totalorder %s15, 1
      %p32 = por %p30, %p31
      %p33 = scmp.ne.s32.totalorder %s25, %s28
      %p34 = scmp.eq.s32.totalorder %s15, 0
      %p35 = por %p33, %p34
      %p36 = scmp.ne.s32.totalorder %s25, %s28
      %p37 = scmp.eq.s32.totalorder %s20, 1
      %p38 = por %p36, %p37
      %p39 = scmp.ne.s32.totalorder %s28, %s29
      %p40 = scmp.eq.s32.totalorder %s20, 0
      %p41 = por %p39, %p40
      %p42 = scmp.ne.s32.totalorder %s28, %s29
      %p43 = scmp.eq.s32.totalorder %s21, 1
      %p44 = por %p42, %p43
      %p46 = scmp.ne.s32.totalorder %s29, %s45
      %p47 = scmp.eq.s32.totalorder %s21, 0
      %p48 = por %p46, %p47
      %s50 = sadd.s32 %s49, 1
      %p53 = scmp.eq.s32.totalorder %s15, 1
      %p54 = scmp.ne.s32.totalorder %s49, %s51
      %p55 = scmp.eq.s32.totalorder %s15, 0
      %p56 = por %p54, %p55
      %p57 = scmp.ne.s32.totalorder %s49, %s51
      %p58 = scmp.eq.s32.totalorder %s20, 1
      %p59 = por %p57, %p58
      %p60 = scmp.ne.s32.totalorder %s51, %s52
      %p61 = scmp.eq.s32.totalorder %s20, 0
      %p62 = por %p60, %p61
      %p63 = scmp.ne.s32.totalorder %s51, %s52
      %p64 = scmp.eq.s32.totalorder %s21, 1
      %p65 = por %p63, %p64
      %p67 = scmp.ne.s32.totalorder %s52, %s66
      %p68 = scmp.eq.s32.totalorder %s21, 0
      %p69 = por %p67, %p68
      %s71 = sadd.s32 %s70, 1
      %p74 = scmp.eq.s32.totalorder %s15, 1
      %p75 = scmp.ne.s32.totalorder %s70, %s72
      %p76 = scmp.eq.s32.totalorder %s15, 0
      %p77 = por %p75, %p76
      %p78 = scmp.ne.s32.totalorder %s70, %s72
      %p79 = scmp.eq.s32.totalorder %s20, 1
      %p80 = por %p78, %p79
      %p81 = scmp.ne.s32.totalorder %s72, %s73
      %p82 = scmp.eq.s32.totalorder %s20, 0
      %p83 = por %p81, %p82
      %p84 = scmp.ne.s32.totalorder %s72, %s73
      %p85 = scmp.eq.s32.totalorder %s21, 1
      %p86 = por %p84, %p85
      %p88 = scmp.ne.s32.totalorder %s73, %s87
      %p89 = scmp.eq.s32.totalorder %s21, 0
      %p90 = por %p88, %p89
      %s92 = sadd.s32 %s91, 1
      %p95 = scmp.eq.s32.totalorder %s15, 1
      %p96 = scmp.ne.s32.totalorder %s91, %s93
      %p97 = scmp.eq.s32.totalorder %s15, 0
      %p98 = por %p96, %p97
      %p99 = scmp.ne.s32.totalorder %s91, %s93
      %p100 = scmp.eq.s32.totalorder %s20, 1
      %p101 = por %p99, %p100
      %p102 = scmp.ne.s32.totalorder %s93, %s94
      %p103 = scmp.eq.s32.totalorder %s20, 0
      %p104 = por %p102, %p103
      %p105 = scmp.ne.s32.totalorder %s93, %s94
      %p106 = scmp.eq.s32.totalorder %s21, 1
      %p107 = por %p105, %p106
      %p109 = scmp.ne.s32.totalorder %s94, %s108
      %p110 = scmp.eq.s32.totalorder %s21, 0
      %p111 = por %p109, %p110
      %s113 = sadd.s32 %s112, 1
      %p116 = scmp.eq.s32.totalorder %s15, 1
      %p117 = scmp.ne.s32.totalorder %s112, %s114
      %p118 = scmp.eq.s32.totalorder %s15, 0
      %p119 = por %p117, %p118
      %p120 = scmp.ne.s32.totalorder %s112, %s114
      %p121 = scmp.eq.s32.totalorder %s20, 1
      %p122 = por %p120, %p121
      %p123 = scmp.ne.s32.totalorder %s114, %s115
      %p124 = scmp.eq.s32.totalorder %s20, 0
      %p125 = por %p123, %p124
      %p126 = scmp.ne.s32.totalorder %s114, %s115
      %p127 = scmp.eq.s32.totalorder %s21, 1
      %p128 = por %p126, %p127
      %p130 = scmp.ne.s32.totalorder %s115, %s129
      %p131 = scmp.eq.s32.totalorder %s21, 0
      %p132 = por %p130, %p131
      %s134 = sadd.s32 %s133, 1
      %p137 = scmp.eq.s32.totalorder %s15, 1
      %p138 = scmp.ne.s32.totalorder %s133, %s135
      %p139 = scmp.eq.s32.totalorder %s15, 0
      %p140 = por %p138, %p139
      %p141 = scmp.ne.s32.totalorder %s133, %s135
      %p142 = scmp.eq.s32.totalorder %s20, 1
      %p143 = por %p141, %p142
      %p144 = scmp.ne.s32.totalorder %s135, %s136
      %p145 = scmp.eq.s32.totalorder %s20, 0
      %p146 = por %p144, %p145
      %p147 = scmp.ne.s32.totalorder %s135, %s136
      %p148 = scmp.eq.s32.totalorder %s21, 1
      %p149 = por %p147, %p148
      %p151 = scmp.ne.s32.totalorder %s136, %s150
      %p152 = scmp.eq.s32.totalorder %s21, 0
      %p153 = por %p151, %p152
      %s154 = ssub.s32 %s15, %s22
      %p155 = scmp.eq.s32.totalorder %s154, 0
      %s157 = sadd.s32 %s156, 1
      %s158 = scalar_select %p155, %s156, %s157
      %p161 = pneg %p155
      %p162 = scmp.eq.s32.totalorder %s15, 1
      %p163 = por %p161, %p162
      %p164 = scmp.ne.s32.totalorder %s156, %s159
      %p165 = scmp.eq.s32.totalorder %s15, 0
      %p166 = por %p164, %p165
      %p167 = scmp.ne.s32.totalorder %s156, %s159
      %p168 = scmp.eq.s32.totalorder %s20, 1
      %p169 = por %p167, %p168
      %p170 = scmp.ne.s32.totalorder %s159, %s160
      %p171 = scmp.eq.s32.totalorder %s20, 0
      %p172 = por %p170, %p171
      %p173 = scmp.ne.s32.totalorder %s159, %s160
      %p174 = scmp.eq.s32.totalorder %s21, 1
      %p175 = por %p173, %p174
      %p177 = scmp.ne.s32.totalorder %s160, %s176
      %p178 = scmp.eq.s32.totalorder %s21, 0
      %p179 = por %p177, %p178
      %p180 = scmp.le.s32.totalorder 1, %s15
      %p181 = scmp.lt.s32.totalorder %s15, 3
      %p182 = pnand %p180, %p181
      %p183 = pneg %p182
      // Predicated region
      $region9: #{tpu_custom_call.1} parent=5 // pred_check
        _
      $region10: #{tpu_custom_call.1} parent=5 // pred_check_branch
        %185 = sbr.rel (%p182) target = $region12
      $region11: #{tpu_custom_call.1} parent=5 // pred_region
        %s186 = ssub.s32 %s15, 1
        // Predicated region
        $region13: #{tpu_custom_call.1} parent=11 // pred_check
          %p187 = pneg %p62
        $region14: #{tpu_custom_call.1} parent=11 // pred_check_branch
          %189 = sbr.rel (%p187) target = $region16
        $region15: #{tpu_custom_call.1} parent=11 // pred_region
          _
        $region16: #{tpu_custom_call.1} parent=11 // pred_fallthru
          _
        // Predicated region
        $region17: #{tpu_custom_call.1} parent=11 // pred_check
          %p190 = pneg %p83
        $region18: #{tpu_custom_call.1} parent=11 // pred_check_branch
          %192 = sbr.rel (%p190) target = $region20
        $region19: #{tpu_custom_call.1} parent=11 // pred_region
          _
        $region20: #{tpu_custom_call.1} parent=11 // pred_fallthru
          _
        // Predicated region
        $region21: #{tpu_custom_call.1} parent=11 // pred_check
          %p193 = pneg %p104
        $region22: #{tpu_custom_call.1} parent=11 // pred_check_branch
          %195 = sbr.rel (%p193) target = $region24
        $region23: #{tpu_custom_call.1} parent=11 // pred_region
          _
        $region24: #{tpu_custom_call.1} parent=11 // pred_fallthru
          _
        // Predicated region
        $region25: #{tpu_custom_call.1} parent=11 // pred_check
          %p196 = pneg %p125
        $region26: #{tpu_custom_call.1} parent=11 // pred_check_branch
          %198 = sbr.rel (%p196) target = $region28
        $region27: #{tpu_custom_call.1} parent=11 // pred_region
          _
        $region28: #{tpu_custom_call.1} parent=11 // pred_fallthru
          _
        // Predicated region
        $region29: #{tpu_custom_call.1} parent=11 // pred_check
          %p199 = pneg %p146
        $region30: #{tpu_custom_call.1} parent=11 // pred_check_branch
          %201 = sbr.rel (%p199) target = $region32
        $region31: #{tpu_custom_call.1} parent=11 // pred_region
          _
        $region32: #{tpu_custom_call.1} parent=11 // pred_fallthru
          _
      $region12: #{tpu_custom_call.1} parent=5 // pred_fallthru
        _
      %p202 = scmp.lt.s32.totalorder %s15, 2
      // Predicated region
      $region33: #{tpu_custom_call.1} parent=5 // pred_check
        %p203 = pneg %p202
      $region34: #{tpu_custom_call.1} parent=5 // pred_check_branch
        %205 = sbr.rel (%p203) target = $region36
      $region35: #{tpu_custom_call.1} parent=5 // pred_region
        // Predicated region
        $region37: #{tpu_custom_call.1} parent=35 // pred_check
          %p206 = pneg %p35
        $region38: #{tpu_custom_call.1} parent=35 // pred_check_branch
          %208 = sbr.rel (%p206) target = $region40
        $region39: #{tpu_custom_call.1} parent=35 // pred_region
          %p209 = scmp.lt.s32.totalorder %s15, 1
          %s210 = scalar_select %p209, %s15, 1
          %s211 = smul.addr %s210, 2
          %s212 = smul.addr %s211, 8
          %s213 = scalar_lea.vmem %s0, %s212
        $region40: #{tpu_custom_call.1} parent=35 // pred_fallthru
          _
      $region36: #{tpu_custom_call.1} parent=5 // pred_fallthru
        _
      %p214 = scmp.le.s32.totalorder 1, %s15
      %p215 = scmp.lt.s32.totalorder %s15, 3
      %p216 = pnand %p214, %p215
      %p217 = pneg %p216
      // Predicated region
      $region41: #{tpu_custom_call.1} parent=5 // pred_check
        _
      $region42: #{tpu_custom_call.1} parent=5 // pred_check_branch
        %219 = sbr.rel (%p216) target = $region44
      $region43: #{tpu_custom_call.1} parent=5 // pred_region
        %s220 = ssub.s32 %s15, 1
        %p221 = scmp.lt.s32.totalorder %s20, 1
        %s222 = scalar_select %p221, %s20, 1
        %s223 = smul.addr %s222, 2
        %s224 = smul.addr %s223, 8
        %s225 = scalar_lea.vmem %s0, %s224
        %p226 = pneg %p41
        %p227 = pneg %p38
        %p228 = pneg %p62
        %p229 = pneg %p59
        %p230 = pneg %p83
        %p231 = pneg %p80
        %p232 = pneg %p104
        %p233 = pneg %p101
        %p234 = pneg %p125
        %p235 = pneg %p122
        %p236 = pneg %p146
        %p237 = pneg %p143
        %p238 = pneg %p172
        %p239 = pneg %p169
        %s240 = sand.u32 %s159, 1
        %s241 = scalar_lea.sflag [#allocation3], %s240
        %s242 = sand.u32 %s159, 1
        %s243 = smul.addr %s242, 128
        %s244 = scalar_lea.vmem [#allocation2], %s243
        %p245 = scmp.lt.s32.totalorder %s20, 1
        %s246 = scalar_select %p245, %s20, 1
        %s247 = smul.addr %s246, 2
        %s248 = smul.addr %s247, 8
        %s249 = scalar_lea.vmem %s0, %s248
        %v250 = vld [vmem:[%s1] sm:$0xff]
        %v251 = vld [vmem:[%s1 + $0x8] sm:$0xff]
        %v252 = vld [vmem:[%s1 + $0x10] sm:$0xff]
        %v253 = vld [vmem:[%s1 + $0x18] sm:$0xff]
        %v254 = vld [vmem:[%s1 + $0x20] sm:$0xff]
        %v255 = vld [vmem:[%s1 + $0x28] sm:$0xff]
        %v256 = vld [vmem:[%s1 + $0x30] sm:$0xff]
        %v257 = vld [vmem:[%s1 + $0x38] sm:$0xff]
        %v258 = vld [vmem:[%s249] sm:$0xff]
        %v259 = vld [vmem:[%s249 + $0x8] sm:$0xff]
        %vm260 = vcmask 64512
        %v262 = vsel %vm260, %v250, 0
        %v265 = vsel %vm260, %v251, 0
        %v268 = vsel %vm260, %v252, 0
        %v271 = vsel %vm260, %v253, 0
        %v274 = vsel %vm260, %v254, 0
        %v277 = vsel %vm260, %v255, 0
        %v280 = vsel %vm260, %v256, 0
        %v283 = vsel %vm260, %v257, 0
        %285 = vmatprep.subr.mxu0 %v259
        %286 = vmatpush1.msra.mxu0 %v258
        %287 = vmatprep.subr.mxu0 0.0
        %288 = vmatpush1.msra.mxu0 0.0
        %289 = vmatprep.subr.mxu0 0.0
        %290 = vmatpush1.msra.mxu0 0.0
        %291 = vmatprep.subr.mxu0 0.0
        %292 = vmatpush1.msra.mxu0 0.0
        %293 = vmatprep.subr.mxu0 0.0
        %294 = vmatpush1.msra.mxu0 0.0
        %295 = vmatprep.subr.mxu0 0.0
        %296 = vmatpush1.msra.mxu0 0.0
        %297 = vmatprep.subr.mxu0 0.0
        %298 = vmatpush1.msra.mxu0 0.0
        %299 = vmatprep.subr.mxu0 0.0
        %300 = vmatpush1.msra.mxu0 0.0
        %301 = vmatprep.subr.mxu0 0.0
        %302 = vmatpush1.msra.mxu0 0.0
        %303 = vmatprep.subr.mxu0 0.0
        %304 = vmatpush1.msra.mxu0 0.0
        %305 = vmatprep.subr.mxu0 0.0
        %306 = vmatpush1.msra.mxu0 0.0
        %307 = vmatprep.subr.mxu0 0.0
        %308 = vmatpush1.msra.mxu0 0.0
        %309 = vmatprep.subr.mxu0 0.0
        %310 = vmatpush1.msra.mxu0 0.0
        %311 = vmatprep.subr.mxu0 0.0
        %312 = vmatpush1.msra.mxu0 0.0
        %313 = vmatprep.subr.mxu0 0.0
        %314 = vmatpush1.msra.mxu0 0.0
        %315 = vmatprep.subr.mxu0 0.0
        %316 = vmatpush1.msra.mxu0 0.0
        %317 = vmatprep.subr.mxu0 0.0
        %318 = vmatpush1.msra.mxu0 0.0
        %319 = vmatprep.subr.mxu0 0.0
        %320 = vmatpush1.msra.mxu0 0.0
        %321 = vmatprep.subr.mxu0 0.0
        %322 = vmatpush1.msra.mxu0 0.0
        %323 = vmatprep.subr.mxu0 0.0
        %324 = vmatpush1.msra.mxu0 0.0
        %325 = vmatprep.subr.mxu0 0.0
        %326 = vmatpush1.msra.mxu0 0.0
        %327 = vmatprep.subr.mxu0 0.0
        %328 = vmatpush1.msra.mxu0 0.0
        %329 = vmatprep.subr.mxu0 0.0
        %330 = vmatpush1.msra.mxu0 0.0
        %331 = vmatprep.subr.mxu0 0.0
        %332 = vmatpush1.msra.mxu0 0.0
        %333 = vmatprep.subr.mxu0 0.0
        %334 = vmatpush1.msra.mxu0 0.0
        %335 = vmatprep.subr.mxu0 0.0
        %336 = vmatpush1.msra.mxu0 0.0
        %337 = vmatprep.subr.mxu0 0.0
        %338 = vmatpush1.msra.mxu0 0.0
        %339 = vmatprep.subr.mxu0 0.0
        %340 = vmatpush1.msra.mxu0 0.0
        %341 = vmatprep.subr.mxu0 0.0
        %342 = vmatpush1.msra.mxu0 0.0
        %343 = vmatprep.subr.mxu0 0.0
        %344 = vmatpush1.msra.mxu0 0.0
        %345 = vmatprep.subr.mxu0 0.0
        %346 = vmatpush1.msra.mxu0 0.0
        %347 = vmatprep.subr.mxu0 0.0
        %348 = vmatpush1.msra.mxu0 0.0
        %349 = vmatprep.mubr.f32.mxu0 0.0
        %350 = vmatmul.mubr.f32.gmra.mrb[0].mxu0 %v262
        %v351 = vpop.f32.mrb[0].mxu0
        %v352 = vadd.f32 0.0, %v351
        %v353 = vpop.f32.mrb[0].mxu0
        %v354 = vadd.f32 0.0, %v353
        %355 = vmatprep.mubr.f32.mxu0 0.0
        %356 = vmatmul.mubr.f32.gmra.mrb[0].mxu0 %v265
        %v357 = vpop.f32.mrb[0].mxu0
        %v358 = vadd.f32 0.0, %v357
        %v359 = vpop.f32.mrb[0].mxu0
        %v360 = vadd.f32 0.0, %v359
        %361 = vmatprep.mubr.f32.mxu0 0.0
        %362 = vmatmul.mubr.f32.gmra.mrb[0].mxu0 %v268
        %v363 = vpop.f32.mrb[0].mxu0
        %v364 = vadd.f32 0.0, %v363
        %v365 = vpop.f32.mrb[0].mxu0
        %v366 = vadd.f32 0.0, %v365
        %367 = vmatprep.mubr.f32.mxu0 0.0
        %368 = vmatmul.mubr.f32.gmra.mrb[0].mxu0 %v271
        %v369 = vpop.f32.mrb[0].mxu0
        %v370 = vadd.f32 0.0, %v369
        %v371 = vpop.f32.mrb[0].mxu0
        %v372 = vadd.f32 0.0, %v371
        %373 = vmatprep.mubr.f32.mxu0 0.0
        %374 = vmatmul.mubr.f32.gmra.mrb[0].mxu0 %v274
        %v375 = vpop.f32.mrb[0].mxu0
        %v376 = vadd.f32 0.0, %v375
        %v377 = vpop.f32.mrb[0].mxu0
        %v378 = vadd.f32 0.0, %v377
        %379 = vmatprep.mubr.f32.mxu0 0.0
        %380 = vmatmul.mubr.f32.gmra.mrb[0].mxu0 %v277
        %v381 = vpop.f32.mrb[0].mxu0
        %v382 = vadd.f32 0.0, %v381
        %v383 = vpop.f32.mrb[0].mxu0
        %v384 = vadd.f32 0.0, %v383
        %385 = vmatprep.mubr.f32.mxu0 0.0
        %386 = vmatmul.mubr.f32.gmra.mrb[0].mxu0 %v280
        %v387 = vpop.f32.mrb[0].mxu0
        %v388 = vadd.f32 0.0, %v387
        %v389 = vpop.f32.mrb[0].mxu0
        %v390 = vadd.f32 0.0, %v389
        %391 = vmatprep.mubr.f32.mxu0 0.0
        %392 = vmatmul.mubr.f32.gmra.mrb[0].mxu0 %v283
        %v393 = vpop.f32.mrb[0].mxu0
        %v394 = vadd.f32 0.0, %v393
        %v395 = vpop.f32.mrb[0].mxu0
        %v396 = vadd.f32 0.0, %v395
        %397 = vdwg.mxu0
        %v398 = vadd.f32 %v352, %v354
        %399 = vadd.xlane.f32.xlu0 %v398
        %v400 = vpop.xlane.xlu0 %399
        %v401 = vadd.f32 %v358, %v360
        %402 = vadd.xlane.f32.xlu0 %v401
        %v403 = vpop.xlane.xlu0 %402
        %v404 = vadd.f32 %v364, %v366
        %405 = vadd.xlane.f32.xlu0 %v404
        %v406 = vpop.xlane.xlu0 %405
        %v407 = vadd.f32 %v370, %v372
        %408 = vadd.xlane.f32.xlu0 %v407
        %v409 = vpop.xlane.xlu0 %408
        %v410 = vadd.f32 %v376, %v378
        %411 = vadd.xlane.f32.xlu0 %v410
        %v412 = vpop.xlane.xlu0 %411
        %v413 = vadd.f32 %v382, %v384
        %414 = vadd.xlane.f32.xlu0 %v413
        %v415 = vpop.xlane.xlu0 %414
        %v416 = vadd.f32 %v388, %v390
        %417 = vadd.xlane.f32.xlu0 %v416
        %v418 = vpop.xlane.xlu0 %417
        %v419 = vadd.f32 %v394, %v396
        %420 = vadd.xlane.f32.xlu0 %v419
        %v421 = vpop.xlane.xlu0 %420
        %v422 = vmul.f32 %v352, %v352
        %v423 = vmul.f32 %v354, %v354
        %v424 = vmul.f32 %v358, %v358
        %v425 = vmul.f32 %v360, %v360
        %v426 = vmul.f32 %v364, %v364
        %v427 = vmul.f32 %v366, %v366
        %v428 = vmul.f32 %v370, %v370
        %v429 = vmul.f32 %v372, %v372
        %v430 = vmul.f32 %v376, %v376
        %v431 = vmul.f32 %v378, %v378
        %v432 = vmul.f32 %v382, %v382
        %v433 = vmul.f32 %v384, %v384
        %v434 = vmul.f32 %v388, %v388
        %v435 = vmul.f32 %v390, %v390
        %v436 = vmul.f32 %v394, %v394
        %v437 = vmul.f32 %v396, %v396
        %v438 = vadd.f32 %v422, %v423
        %439 = vadd.xlane.f32.xlu0 %v438
        %v440 = vpop.xlane.xlu0 %439
        %v441 = vadd.f32 %v424, %v425
        %442 = vadd.xlane.f32.xlu0 %v441
        %v443 = vpop.xlane.xlu0 %442
        %v444 = vadd.f32 %v426, %v427
        %445 = vadd.xlane.f32.xlu0 %v444
        %v446 = vpop.xlane.xlu0 %445
        %v447 = vadd.f32 %v428, %v429
        %448 = vadd.xlane.f32.xlu0 %v447
        %v449 = vpop.xlane.xlu0 %448
        %v450 = vadd.f32 %v430, %v431
        %451 = vadd.xlane.f32.xlu0 %v450
        %v452 = vpop.xlane.xlu0 %451
        %v453 = vadd.f32 %v432, %v433
        %454 = vadd.xlane.f32.xlu0 %v453
        %v455 = vpop.xlane.xlu0 %454
        %v456 = vadd.f32 %v434, %v435
        %457 = vadd.xlane.f32.xlu0 %v456
        %v458 = vpop.xlane.xlu0 %457
        %v459 = vadd.f32 %v436, %v437
        %460 = vadd.xlane.f32.xlu0 %v459
        %v461 = vpop.xlane.xlu0 %460
        %v462 = vld [vmem:[%s2] sm:$0xff]
        %v463 = vld [vmem:[%s2 + $0x8] sm:$0xff]
        %v464 = vld [vmem:[%s2 + $0x10] sm:$0xff]
        %v465 = vld [vmem:[%s2 + $0x18] sm:$0xff]
        %v466 = vld [vmem:[%s2 + $0x20] sm:$0xff]
        %v467 = vld [vmem:[%s2 + $0x28] sm:$0xff]
        %v468 = vld [vmem:[%s2 + $0x30] sm:$0xff]
        %v469 = vld [vmem:[%s2 + $0x38] sm:$0xff]
        %v470 = vmul.f32 %v462, 256.0
        %v471 = vmul.f32 %v463, 256.0
        %v472 = vmul.f32 %v464, 256.0
        %v473 = vmul.f32 %v465, 256.0
        %v474 = vmul.f32 %v466, 256.0
        %v475 = vmul.f32 %v467, 256.0
        %v476 = vmul.f32 %v468, 256.0
        %v477 = vmul.f32 %v469, 256.0
        %v478 = vadd.f32 %v400, %v470
        %v479 = vadd.f32 %v403, %v471
        %v480 = vadd.f32 %v406, %v472
        %v481 = vadd.f32 %v409, %v473
        %v482 = vadd.f32 %v412, %v474
        %v483 = vadd.f32 %v415, %v475
        %v484 = vadd.f32 %v418, %v476
        %v485 = vadd.f32 %v421, %v477
        %v486 = vmul.f32 %v462, 2.0
        %v487 = vmul.f32 %v463, 2.0
        %v488 = vmul.f32 %v464, 2.0
        %v489 = vmul.f32 %v465, 2.0
        %v490 = vmul.f32 %v466, 2.0
        %v491 = vmul.f32 %v467, 2.0
        %v492 = vmul.f32 %v468, 2.0
        %v493 = vmul.f32 %v469, 2.0
        %v494 = vmul.f32 %v486, %v400
        %v495 = vmul.f32 %v487, %v403
        %v496 = vmul.f32 %v488, %v406
        %v497 = vmul.f32 %v489, %v409
        %v498 = vmul.f32 %v490, %v412
        %v499 = vmul.f32 %v491, %v415
        %v500 = vmul.f32 %v492, %v418
        %v501 = vmul.f32 %v493, %v421
        %v502 = vadd.f32 %v440, %v494
        %v503 = vadd.f32 %v443, %v495
        %v504 = vadd.f32 %v446, %v496
        %v505 = vadd.f32 %v449, %v497
        %v506 = vadd.f32 %v452, %v498
        %v507 = vadd.f32 %v455, %v499
        %v508 = vadd.f32 %v458, %v500
        %v509 = vadd.f32 %v461, %v501
        %v510 = vmul.f32 %v462, %v462
        %v511 = vmul.f32 %v463, %v463
        %v512 = vmul.f32 %v464, %v464
        %v513 = vmul.f32 %v465, %v465
        %v514 = vmul.f32 %v466, %v466
        %v515 = vmul.f32 %v467, %v467
        %v516 = vmul.f32 %v468, %v468
        %v517 = vmul.f32 %v469, %v469
        %v518 = vmul.f32 %v510, 256.0
        %v519 = vmul.f32 %v511, 256.0
        %v520 = vmul.f32 %v512, 256.0
        %v521 = vmul.f32 %v513, 256.0
        %v522 = vmul.f32 %v514, 256.0
        %v523 = vmul.f32 %v515, 256.0
        %v524 = vmul.f32 %v516, 256.0
        %v525 = vmul.f32 %v517, 256.0
        %v526 = vadd.f32 %v502, %v518
        %v527 = vadd.f32 %v503, %v519
        %v528 = vadd.f32 %v504, %v520
        %v529 = vadd.f32 %v505, %v521
        %v530 = vadd.f32 %v506, %v522
        %v531 = vadd.f32 %v507, %v523
        %v532 = vadd.f32 %v508, %v524
        %v533 = vadd.f32 %v509, %v525
        %v534 = vld [vmem:[%s3] sm:$0xff]
        %v535 = vld [vmem:[%s3 + $0x8] sm:$0xff]
        %v536 = vld [vmem:[%s3 + $0x10] sm:$0xff]
        %v537 = vld [vmem:[%s3 + $0x18] sm:$0xff]
        %v538 = vld [vmem:[%s3 + $0x20] sm:$0xff]
        %v539 = vld [vmem:[%s3 + $0x28] sm:$0xff]
        %v540 = vld [vmem:[%s3 + $0x30] sm:$0xff]
        %v541 = vld [vmem:[%s3 + $0x38] sm:$0xff]
        %vm542 = vcmask 523264
        %v544 = vsel %vm542, %v534, 0
        %v547 = vsel %vm542, %v535, 0
        %v550 = vsel %vm542, %v536, 0
        %v553 = vsel %vm542, %v537, 0
        %v556 = vsel %vm542, %v538, 0
        %v559 = vsel %vm542, %v539, 0
        %v562 = vsel %vm542, %v540, 0
        %v565 = vsel %vm542, %v541, 0
        %567 = vmatprep.subr.mxu0 0.0
        %568 = vmatpush1.msra.mxu0 %v478
        %569 = vmatprep.subr.mxu0 0.0
        %570 = vmatpush1.msra.mxu0 %v479
        %571 = vmatprep.subr.mxu0 0.0
        %572 = vmatpush1.msra.mxu0 %v480
        %573 = vmatprep.subr.mxu0 0.0
        %574 = vmatpush1.msra.mxu0 %v481
        %575 = vmatprep.subr.mxu0 0.0
        %576 = vmatpush1.msra.mxu0 %v482
        %577 = vmatprep.subr.mxu0 0.0
        %578 = vmatpush1.msra.mxu0 %v483
        %579 = vmatprep.subr.mxu0 0.0
        %580 = vmatpush1.msra.mxu0 %v484
        %581 = vmatprep.subr.mxu0 0.0
        %582 = vmatpush1.msra.mxu0 %v485
        %583 = vmatprep.subr.mxu0 0.0
        %584 = vmatpush1.msra.mxu0 0.0
        %585 = vmatprep.subr.mxu0 0.0
        %586 = vmatpush1.msra.mxu0 0.0
        %587 = vmatprep.subr.mxu0 0.0
        %588 = vmatpush1.msra.mxu0 0.0
        %589 = vmatprep.subr.mxu0 0.0
        %590 = vmatpush1.msra.mxu0 0.0
        %591 = vmatprep.subr.mxu0 0.0
        %592 = vmatpush1.msra.mxu0 0.0
        %593 = vmatprep.subr.mxu0 0.0
        %594 = vmatpush1.msra.mxu0 0.0
        %595 = vmatprep.subr.mxu0 0.0
        %596 = vmatpush1.msra.mxu0 0.0
        %597 = vmatprep.subr.mxu0 0.0
        %598 = vmatpush1.msra.mxu0 0.0
        %599 = vmatprep.subr.mxu0 0.0
        %600 = vmatpush1.msra.mxu0 0.0
        %601 = vmatprep.subr.mxu0 0.0
        %602 = vmatpush1.msra.mxu0 0.0
        %603 = vmatprep.subr.mxu0 0.0
        %604 = vmatpush1.msra.mxu0 0.0
        %605 = vmatprep.subr.mxu0 0.0
        %606 = vmatpush1.msra.mxu0 0.0
        %607 = vmatprep.subr.mxu0 0.0
        %608 = vmatpush1.msra.mxu0 0.0
        %609 = vmatprep.subr.mxu0 0.0
        %610 = vmatpush1.msra.mxu0 0.0
        %611 = vmatprep.subr.mxu0 0.0
        %612 = vmatpush1.msra.mxu0 0.0
        %613 = vmatprep.subr.mxu0 0.0
        %614 = vmatpush1.msra.mxu0 0.0
        %615 = vmatprep.subr.mxu0 0.0
        %616 = vmatpush1.msra.mxu0 0.0
        %617 = vmatprep.subr.mxu0 0.0
        %618 = vmatpush1.msra.mxu0 0.0
        %619 = vmatprep.subr.mxu0 0.0
        %620 = vmatpush1.msra.mxu0 0.0
        %621 = vmatprep.subr.mxu0 0.0
        %622 = vmatpush1.msra.mxu0 0.0
        %623 = vmatprep.subr.mxu0 0.0
        %624 = vmatpush1.msra.mxu0 0.0
        %625 = vmatprep.subr.mxu0 0.0
        %626 = vmatpush1.msra.mxu0 0.0
        %627 = vmatprep.subr.mxu0 0.0
        %628 = vmatpush1.msra.mxu0 0.0
        %629 = vmatprep.subr.mxu0 0.0
        %630 = vmatpush1.msra.mxu0 0.0
        %631 = vmatprep.mubr.f32.mxu0 0.0
        %632 = vmatmul.mubr.f32.gmra.mrb[0].mxu0 %v544
        %v633 = vpop.f32.mrb[0].mxu0
        %v634 = vadd.f32 0.0, %v633
        %v635 = vpop.f32.mrb[0].mxu0
        %636 = vmatprep.mubr.f32.mxu0 0.0
        %637 = vmatmul.mubr.f32.gmra.mrb[0].mxu0 %v547
        %v638 = vpop.f32.mrb[0].mxu0
        %v639 = vadd.f32 0.0, %v638
        %v640 = vpop.f32.mrb[0].mxu0
        %641 = vmatprep.mubr.f32.mxu0 0.0
        %642 = vmatmul.mubr.f32.gmra.mrb[0].mxu0 %v550
        %v643 = vpop.f32.mrb[0].mxu0
        %v644 = vadd.f32 0.0, %v643
        %v645 = vpop.f32.mrb[0].mxu0
        %646 = vmatprep.mubr.f32.mxu0 0.0
        %647 = vmatmul.mubr.f32.gmra.mrb[0].mxu0 %v553
        %v648 = vpop.f32.mrb[0].mxu0
        %v649 = vadd.f32 0.0, %v648
        %v650 = vpop.f32.mrb[0].mxu0
        %651 = vmatprep.mubr.f32.mxu0 0.0
        %652 = vmatmul.mubr.f32.gmra.mrb[0].mxu0 %v556
        %v653 = vpop.f32.mrb[0].mxu0
        %v654 = vadd.f32 0.0, %v653
        %v655 = vpop.f32.mrb[0].mxu0
        %656 = vmatprep.mubr.f32.mxu0 0.0
        %657 = vmatmul.mubr.f32.gmra.mrb[0].mxu0 %v559
        %v658 = vpop.f32.mrb[0].mxu0
        %v659 = vadd.f32 0.0, %v658
        %v660 = vpop.f32.mrb[0].mxu0
        %661 = vmatprep.mubr.f32.mxu0 0.0
        %662 = vmatmul.mubr.f32.gmra.mrb[0].mxu0 %v562
        %v663 = vpop.f32.mrb[0].mxu0
        %v664 = vadd.f32 0.0, %v663
        %v665 = vpop.f32.mrb[0].mxu0
        %666 = vmatprep.mubr.f32.mxu0 0.0
        %667 = vmatmul.mubr.f32.gmra.mrb[0].mxu0 %v565
        %v668 = vpop.f32.mrb[0].mxu0
        %v669 = vadd.f32 0.0, %v668
        %v670 = vpop.f32.mrb[0].mxu0
        %671 = vdwg.mxu0
        %672 = vmatprep.subr.mxu0 0.0
        %673 = vmatpush1.msra.mxu0 %v526
        %674 = vmatprep.subr.mxu0 0.0
        %675 = vmatpush1.msra.mxu0 %v527
        %676 = vmatprep.subr.mxu0 0.0
        %677 = vmatpush1.msra.mxu0 %v528
        %678 = vmatprep.subr.mxu0 0.0
        %679 = vmatpush1.msra.mxu0 %v529
        %680 = vmatprep.subr.mxu0 0.0
        %681 = vmatpush1.msra.mxu0 %v530
        %682 = vmatprep.subr.mxu0 0.0
        %683 = vmatpush1.msra.mxu0 %v531
        %684 = vmatprep.subr.mxu0 0.0
        %685 = vmatpush1.msra.mxu0 %v532
        %686 = vmatprep.subr.mxu0 0.0
        %687 = vmatpush1.msra.mxu0 %v533
        %688 = vmatprep.subr.mxu0 0.0
        %689 = vmatpush1.msra.mxu0 0.0
        %690 = vmatprep.subr.mxu0 0.0
        %691 = vmatpush1.msra.mxu0 0.0
        %692 = vmatprep.subr.mxu0 0.0
        %693 = vmatpush1.msra.mxu0 0.0
        %694 = vmatprep.subr.mxu0 0.0
        %695 = vmatpush1.msra.mxu0 0.0
        %696 = vmatprep.subr.mxu0 0.0
        %697 = vmatpush1.msra.mxu0 0.0
        %698 = vmatprep.subr.mxu0 0.0
        %699 = vmatpush1.msra.mxu0 0.0
        %700 = vmatprep.subr.mxu0 0.0
        %701 = vmatpush1.msra.mxu0 0.0
        %702 = vmatprep.subr.mxu0 0.0
        %703 = vmatpush1.msra.mxu0 0.0
        %704 = vmatprep.subr.mxu0 0.0
        %705 = vmatpush1.msra.mxu0 0.0
        %706 = vmatprep.subr.mxu0 0.0
        %707 = vmatpush1.msra.mxu0 0.0
        %708 = vmatprep.subr.mxu0 0.0
        %709 = vmatpush1.msra.mxu0 0.0
        %710 = vmatprep.subr.mxu0 0.0
        %711 = vmatpush1.msra.mxu0 0.0
        %712 = vmatprep.subr.mxu0 0.0
        %713 = vmatpush1.msra.mxu0 0.0
        %714 = vmatprep.subr.mxu0 0.0
        %715 = vmatpush1.msra.mxu0 0.0
        %716 = vmatprep.subr.mxu0 0.0
        %717 = vmatpush1.msra.mxu0 0.0
        %718 = vmatprep.subr.mxu0 0.0
        %719 = vmatpush1.msra.mxu0 0.0
        %720 = vmatprep.subr.mxu0 0.0
        %721 = vmatpush1.msra.mxu0 0.0
        %722 = vmatprep.subr.mxu0 0.0
        %723 = vmatpush1.msra.mxu0 0.0
        %724 = vmatprep.subr.mxu0 0.0
        %725 = vmatpush1.msra.mxu0 0.0
        %726 = vmatprep.subr.mxu0 0.0
        %727 = vmatpush1.msra.mxu0 0.0
        %728 = vmatprep.subr.mxu0 0.0
        %729 = vmatpush1.msra.mxu0 0.0
        %730 = vmatprep.subr.mxu0 0.0
        %731 = vmatpush1.msra.mxu0 0.0
        %732 = vmatprep.subr.mxu0 0.0
        %733 = vmatpush1.msra.mxu0 0.0
        %734 = vmatprep.subr.mxu0 0.0
        %735 = vmatpush1.msra.mxu0 0.0
        %736 = vmatprep.mubr.f32.mxu0 0.0
        %737 = vmatmul.mubr.f32.gmra.mrb[0].mxu0 %v544
        %v738 = vpop.f32.mrb[0].mxu0
        %v739 = vadd.f32 0.0, %v738
        %v740 = vpop.f32.mrb[0].mxu0
        %741 = vmatprep.mubr.f32.mxu0 0.0
        %742 = vmatmul.mubr.f32.gmra.mrb[0].mxu0 %v547
        %v743 = vpop.f32.mrb[0].mxu0
        %v744 = vadd.f32 0.0, %v743
        %v745 = vpop.f32.mrb[0].mxu0
        %746 = vmatprep.mubr.f32.mxu0 0.0
        %747 = vmatmul.mubr.f32.gmra.mrb[0].mxu0 %v550
        %v748 = vpop.f32.mrb[0].mxu0
        %v749 = vadd.f32 0.0, %v748
        %v750 = vpop.f32.mrb[0].mxu0
        %751 = vmatprep.mubr.f32.mxu0 0.0
        %752 = vmatmul.mubr.f32.gmra.mrb[0].mxu0 %v553
        %v753 = vpop.f32.mrb[0].mxu0
        %v754 = vadd.f32 0.0, %v753
        %v755 = vpop.f32.mrb[0].mxu0
        %756 = vmatprep.mubr.f32.mxu0 0.0
        %757 = vmatmul.mubr.f32.gmra.mrb[0].mxu0 %v556
        %v758 = vpop.f32.mrb[0].mxu0
        %v759 = vadd.f32 0.0, %v758
        %v760 = vpop.f32.mrb[0].mxu0
        %761 = vmatprep.mubr.f32.mxu0 0.0
        %762 = vmatmul.mubr.f32.gmra.mrb[0].mxu0 %v559
        %v763 = vpop.f32.mrb[0].mxu0
        %v764 = vadd.f32 0.0, %v763
        %v765 = vpop.f32.mrb[0].mxu0
        %766 = vmatprep.mubr.f32.mxu0 0.0
        %767 = vmatmul.mubr.f32.gmra.mrb[0].mxu0 %v562
        %v768 = vpop.f32.mrb[0].mxu0
        %v769 = vadd.f32 0.0, %v768
        %v770 = vpop.f32.mrb[0].mxu0
        %771 = vmatprep.mubr.f32.mxu0 0.0
        %772 = vmatmul.mubr.f32.gmra.mrb[0].mxu0 %v565
        %v773 = vpop.f32.mrb[0].mxu0
        %v774 = vadd.f32 0.0, %v773
        %v775 = vpop.f32.mrb[0].mxu0
        %776 = vdwg.mxu0
        %v777 = vrcp.pop 512.0
        %v778 = vmul.f32 %v634, %v777
        %v779 = vmul.f32 %v639, %v777
        %v780 = vmul.f32 %v644, %v777
        %v781 = vmul.f32 %v649, %v777
        %v782 = vmul.f32 %v654, %v777
        %v783 = vmul.f32 %v659, %v777
        %v784 = vmul.f32 %v664, %v777
        %v785 = vmul.f32 %v669, %v777
        %v786 = vmul.f32 %v739, %v777
        %v787 = vmul.f32 %v744, %v777
        %v788 = vmul.f32 %v749, %v777
        %v789 = vmul.f32 %v754, %v777
        %v790 = vmul.f32 %v759, %v777
        %v791 = vmul.f32 %v764, %v777
        %v792 = vmul.f32 %v769, %v777
        %v793 = vmul.f32 %v774, %v777
        %v794 = vmul.f32 %v778, %v778
        %v795 = vmul.f32 %v779, %v779
        %v796 = vmul.f32 %v780, %v780
        %v797 = vmul.f32 %v781, %v781
        %v798 = vmul.f32 %v782, %v782
        %v799 = vmul.f32 %v783, %v783
        %v800 = vmul.f32 %v784, %v784
        %v801 = vmul.f32 %v785, %v785
        %v802 = vsub.f32 %v786, %v794
        %v803 = vsub.f32 %v787, %v795
        %v804 = vsub.f32 %v788, %v796
        %v805 = vsub.f32 %v789, %v797
        %v806 = vsub.f32 %v790, %v798
        %v807 = vsub.f32 %v791, %v799
        %v808 = vsub.f32 %v792, %v800
        %v809 = vsub.f32 %v793, %v801
        %v810 = vmax.f32 %v802, 0.0
        %v811 = vmax.f32 %v803, 0.0
        %v812 = vmax.f32 %v804, 0.0
        %v813 = vmax.f32 %v805, 0.0
        %v814 = vmax.f32 %v806, 0.0
        %v815 = vmax.f32 %v807, 0.0
        %v816 = vmax.f32 %v808, 0.0
        %v817 = vmax.f32 %v809, 0.0
        %v818 = vadd.f32 %v810, 1e-05
        %v819 = vadd.f32 %v811, 1e-05
        %v820 = vadd.f32 %v812, 1e-05
        %v821 = vadd.f32 %v813, 1e-05
        %v822 = vadd.f32 %v814, 1e-05
        %v823 = vadd.f32 %v815, 1e-05
        %v824 = vadd.f32 %v816, 1e-05
        %v825 = vadd.f32 %v817, 1e-05
        %v826 = vrsqrt.pop %v818
        %v827 = vrsqrt.pop %v819
        %v828 = vrsqrt.pop %v820
        %v829 = vrsqrt.pop %v821
        %v830 = vrsqrt.pop %v822
        %v831 = vrsqrt.pop %v823
        %v832 = vrsqrt.pop %v824
        %v833 = vrsqrt.pop %v825
        %v834 = vld [vmem:[%s4] sm:$0xff]
        %v835 = vld [vmem:[%s4 + $0x8] sm:$0xff]
        %v836 = vld [vmem:[%s4 + $0x10] sm:$0xff]
        %v837 = vld [vmem:[%s4 + $0x18] sm:$0xff]
        %v838 = vld [vmem:[%s4 + $0x20] sm:$0xff]
        %v839 = vld [vmem:[%s4 + $0x28] sm:$0xff]
        %v840 = vld [vmem:[%s4 + $0x30] sm:$0xff]
        %v841 = vld [vmem:[%s4 + $0x38] sm:$0xff]
        %v842 = vmul.f32 %v826, %v834
        %v843 = vmul.f32 %v827, %v835
        %v844 = vmul.f32 %v828, %v836
        %v845 = vmul.f32 %v829, %v837
        %v846 = vmul.f32 %v830, %v838
        %v847 = vmul.f32 %v831, %v839
        %v848 = vmul.f32 %v832, %v840
        %v849 = vmul.f32 %v833, %v841
        %v850 = vsub.f32 %v462, %v778
        %v851 = vsub.f32 %v463, %v779
        %v852 = vsub.f32 %v464, %v780
        %v853 = vsub.f32 %v465, %v781
        %v854 = vsub.f32 %v466, %v782
        %v855 = vsub.f32 %v467, %v783
        %v856 = vsub.f32 %v468, %v784
        %v857 = vsub.f32 %v469, %v785
        %v858 = vmul.f32 %v850, %v842
        %v859 = vmul.f32 %v851, %v843
        %v860 = vmul.f32 %v852, %v844
        %v861 = vmul.f32 %v853, %v845
        %v862 = vmul.f32 %v854, %v846
        %v863 = vmul.f32 %v855, %v847
        %v864 = vmul.f32 %v856, %v848
        %v865 = vmul.f32 %v857, %v849
        %v866 = vld [vmem:[%s5] sm:$0xff]
        %v867 = vld [vmem:[%s5 + $0x8] sm:$0xff]
        %v868 = vld [vmem:[%s5 + $0x10] sm:$0xff]
        %v869 = vld [vmem:[%s5 + $0x18] sm:$0xff]
        %v870 = vld [vmem:[%s5 + $0x20] sm:$0xff]
        %v871 = vld [vmem:[%s5 + $0x28] sm:$0xff]
        %v872 = vld [vmem:[%s5 + $0x30] sm:$0xff]
        %v873 = vld [vmem:[%s5 + $0x38] sm:$0xff]
        %v874 = vadd.f32 %v858, %v866
        %v875 = vadd.f32 %v859, %v867
        %v876 = vadd.f32 %v860, %v868
        %v877 = vadd.f32 %v861, %v869
        %v878 = vadd.f32 %v862, %v870
        %v879 = vadd.f32 %v863, %v871
        %v880 = vadd.f32 %v864, %v872
        %v881 = vadd.f32 %v865, %v873
        %883 = vset.pattern.permute.xlu0 0
        %884 = vperm.xlu0 %883, %v842
        %v885 = vpop.permute.xlu0 %884
        %888 = vset.pattern.permute.xlu0 0
        %889 = vperm.xlu0 %888, %v843
        %v890 = vpop.permute.xlu0 %889
        %893 = vset.pattern.permute.xlu0 0
        %894 = vperm.xlu0 %893, %v844
        %v895 = vpop.permute.xlu0 %894
        %898 = vset.pattern.permute.xlu0 0
        %899 = vperm.xlu0 %898, %v845
        %v900 = vpop.permute.xlu0 %899
        %903 = vset.pattern.permute.xlu0 0
        %904 = vperm.xlu0 %903, %v846
        %v905 = vpop.permute.xlu0 %904
        %908 = vset.pattern.permute.xlu0 0
        %909 = vperm.xlu0 %908, %v847
        %v910 = vpop.permute.xlu0 %909
        %913 = vset.pattern.permute.xlu0 0
        %914 = vperm.xlu0 %913, %v848
        %v915 = vpop.permute.xlu0 %914
        %918 = vset.pattern.permute.xlu0 0
        %919 = vperm.xlu0 %918, %v849
        %v920 = vpop.permute.xlu0 %919
        %v922 = vmul.f32 %v352, %v885
        %v923 = vmul.f32 %v354, %v885
        %v924 = vmul.f32 %v358, %v890
        %v925 = vmul.f32 %v360, %v890
        %v926 = vmul.f32 %v364, %v895
        %v927 = vmul.f32 %v366, %v895
        %v928 = vmul.f32 %v370, %v900
        %v929 = vmul.f32 %v372, %v900
        %v930 = vmul.f32 %v376, %v905
        %v931 = vmul.f32 %v378, %v905
        %v932 = vmul.f32 %v382, %v910
        %v933 = vmul.f32 %v384, %v910
        %v934 = vmul.f32 %v388, %v915
        %v935 = vmul.f32 %v390, %v915
        %v936 = vmul.f32 %v394, %v920
        %v937 = vmul.f32 %v396, %v920
        %939 = vset.pattern.permute.xlu0 0
        %940 = vperm.xlu0 %939, %v874
        %v941 = vpop.permute.xlu0 %940
        %944 = vset.pattern.permute.xlu0 0
        %945 = vperm.xlu0 %944, %v875
        %v946 = vpop.permute.xlu0 %945
        %949 = vset.pattern.permute.xlu0 0
        %950 = vperm.xlu0 %949, %v876
        %v951 = vpop.permute.xlu0 %950
        %954 = vset.pattern.permute.xlu0 0
        %955 = vperm.xlu0 %954, %v877
        %v956 = vpop.permute.xlu0 %955
        %959 = vset.pattern.permute.xlu0 0
        %960 = vperm.xlu0 %959, %v878
        %v961 = vpop.permute.xlu0 %960
        %964 = vset.pattern.permute.xlu0 0
        %965 = vperm.xlu0 %964, %v879
        %v966 = vpop.permute.xlu0 %965
        %969 = vset.pattern.permute.xlu0 0
        %970 = vperm.xlu0 %969, %v880
        %v971 = vpop.permute.xlu0 %970
        %974 = vset.pattern.permute.xlu0 0
        %975 = vperm.xlu0 %974, %v881
        %v976 = vpop.permute.xlu0 %975
        %v978 = vadd.f32 %v922, %v941
        %v979 = vadd.f32 %v923, %v941
        %v980 = vadd.f32 %v924, %v946
        %v981 = vadd.f32 %v925, %v946
        %v982 = vadd.f32 %v926, %v951
        %v983 = vadd.f32 %v927, %v951
        %v984 = vadd.f32 %v928, %v956
        %v985 = vadd.f32 %v929, %v956
        %v986 = vadd.f32 %v930, %v961
        %v987 = vadd.f32 %v931, %v961
        %v988 = vadd.f32 %v932, %v966
        %v989 = vadd.f32 %v933, %v966
        %v990 = vadd.f32 %v934, %v971
        %v991 = vadd.f32 %v935, %v971
        %v992 = vadd.f32 %v936, %v976
        %v993 = vadd.f32 %v937, %v976
        %v994 = vmax.f32 %v978, 0.0
        %v995 = vmax.f32 %v979, 0.0
        %v996 = vmax.f32 %v980, 0.0
        %v997 = vmax.f32 %v981, 0.0
        %v998 = vmax.f32 %v982, 0.0
        %v999 = vmax.f32 %v983, 0.0
        %v1000 = vmax.f32 %v984, 0.0
        %v1001 = vmax.f32 %v985, 0.0
        %v1002 = vmax.f32 %v986, 0.0
        %v1003 = vmax.f32 %v987, 0.0
        %v1004 = vmax.f32 %v988, 0.0
        %v1005 = vmax.f32 %v989, 0.0
        %v1006 = vmax.f32 %v990, 0.0
        %v1007 = vmax.f32 %v991, 0.0
        %v1008 = vmax.f32 %v992, 0.0
        %v1009 = vmax.f32 %v993, 0.0
        %1010 = vst [vmem:[%s244] sm:$0xff] %v994
        %1011 = vst [vmem:[%s244 + $0x8] sm:$0xff] %v995
        %1012 = vst [vmem:[%s244 + $0x10] sm:$0xff] %v996
        %1013 = vst [vmem:[%s244 + $0x18] sm:$0xff] %v997
        %1014 = vst [vmem:[%s244 + $0x20] sm:$0xff] %v998
        %1015 = vst [vmem:[%s244 + $0x28] sm:$0xff] %v999
        %1016 = vst [vmem:[%s244 + $0x30] sm:$0xff] %v1000
        %1017 = vst [vmem:[%s244 + $0x38] sm:$0xff] %v1001
        %1018 = vst [vmem:[%s244 + $0x40] sm:$0xff] %v1002
        %1019 = vst [vmem:[%s244 + $0x48] sm:$0xff] %v1003
        %1020 = vst [vmem:[%s244 + $0x50] sm:$0xff] %v1004
        %1021 = vst [vmem:[%s244 + $0x58] sm:$0xff] %v1005
        %1022 = vst [vmem:[%s244 + $0x60] sm:$0xff] %v1006
        %1023 = vst [vmem:[%s244 + $0x68] sm:$0xff] %v1007
        %1024 = vst [vmem:[%s244 + $0x70] sm:$0xff] %v1008
        %1025 = vst [vmem:[%s244 + $0x78] sm:$0xff] %v1009
        %s1026 = sand.u32 %s159, 1
        %s1027 = scalar_lea.sflag [#allocation3], %s1026
        %s1028 = sand.u32 %s159, 1
        %s1029 = smul.addr %s1028, 128
        %s1030 = scalar_lea.vmem [#allocation2], %s1029
        // Predicated region
        $region45: #{tpu_custom_call.1} parent=43 // pred_check
          %p1031 = pneg %p169
        $region46: #{tpu_custom_call.1} parent=43 // pred_check_branch
          %1033 = sbr.rel (%p1031) target = $region48
        $region47: #{tpu_custom_call.1} parent=43 // pred_region
          %s1035 = ssub.s32 2048, 2048
          %1036 = vsyncadd %s1027, %s1035
          %s1037 = smul.addr %s20, 16
          %s1038 = smul.addr %s1037, 128
          %s1039 = scalar_lea.hbm %s6, %s1038
          %s1040 = sshll.u32 %s1030, 4
          %s1041 = int_to_ptr.vmem [resolvable:$true] %s1040
          %1046 = dma.vmem_to_hbm [thread:$0]  %s1041, 2048, %s1039, %s1027, 256, 256, 16
        $region48: #{tpu_custom_call.1} parent=43 // pred_fallthru
          _
      $region44: #{tpu_custom_call.1} parent=5 // pred_fallthru
        _
      %p1047 = scmp.le.s32.totalorder 2, %s15
      // Predicated region
      $region49: #{tpu_custom_call.1} parent=5 // pred_check
        %p1048 = pneg %p1047
      $region50: #{tpu_custom_call.1} parent=5 // pred_check_branch
        %1050 = sbr.rel (%p1048) target = $region52
      $region51: #{tpu_custom_call.1} parent=5 // pred_region
        %s1051 = ssub.s32 %s15, 2
        // Predicated region
        $region53: #{tpu_custom_call.1} parent=51 // pred_check
          %p1052 = pneg %p175
        $region54: #{tpu_custom_call.1} parent=51 // pred_check_branch
          %1054 = sbr.rel (%p1052) target = $region56
        $region55: #{tpu_custom_call.1} parent=51 // pred_region
          %s1055 = sand.u32 %s160, 1
          %s1056 = scalar_lea.sflag [#allocation3], %s1055
          %s1057 = sand.u32 %s160, 1
          %s1058 = smul.addr %s1057, 128
          %s1059 = scalar_lea.vmem [#allocation2], %s1058
          %1060 = dma.done %s1056, 2048
        $region56: #{tpu_custom_call.1} parent=51 // pred_fallthru
          _
      $region52: #{tpu_custom_call.1} parent=5 // pred_fallthru
        _
    $region6: #{tpu_custom_call.1} parent=1 // loop_footer
      %s19 = sadd.s32 1, %s15
    $region7: #{tpu_custom_call.1} parent=1 // loop_footer_branch
      %14 = sbr.rel target = $region3
    $region8: #{tpu_custom_call.1} parent=1 // loop_exit
      _
    %1061 = vsyncpa [#allocation3], 1
    %s1062 = scalar_lea.sflag [#allocation3], 1
    %1063 = vsyncpa %s1062, 1

</llo_original>
